<compile_context>
chip_gen: v5e
topology: v5e:2x2
jax: 0.10.0
libtpu: 0.0.40
codegen_flags: <defaults>
</compile_context>

<pallas_src>
import jax
import jax.numpy as jnp
from jax.experimental import pallas as pl
from jax.experimental.pallas import tpu as pltpu


# Inputs above this take the tiled (grid >= 2) path so the copy is
# double-buffered / split across both v7x TensorCores.
_MIN_TILED_BYTES = 1 * 1024 * 1024


def _copy_cost(nbytes: int) -> pl.CostEstimate:
    # Pure memory traffic: one HBM read + one HBM write, zero compute.
    return pl.CostEstimate(flops=0, transcendentals=0, bytes_accessed=2 * nbytes)


def _tuning():
    """Per-generation (block_bytes, vmem_limit_bytes).

    v5e / v6e (128 MiB physical VMEM): 16 MiB blocks -> 4 x 16 = 64 MiB
    double-buffered in+out, ~1-2% per-step overhead at HBM roofline.
    v7x (64 MiB physical VMEM): 8 MiB blocks -> 4 x 8 = 32 MiB footprint.
    Defaults conservatively to the v7x numbers if the query fails.
    """
    vmem_cap = 64 * 1024 * 1024
    try:
        info = pltpu.get_tpu_info()
        vmem_cap = int(getattr(info, "vmem_capacity_bytes", vmem_cap))
    except Exception:
        pass
    if vmem_cap >= 100 * 1024 * 1024:          # v5e / v6e
        return 16 * 1024 * 1024, 80 * 1024 * 1024
    return 8 * 1024 * 1024, 40 * 1024 * 1024   # v7x (and unknown)


def _copy_kernel(x_ref, o_ref):
    # Straight VMEM tile copy.
    o_ref[...] = x_ref[...]


def _dma_copy_kernel(x_ref, o_ref, sem):
    # Direct HBM -> HBM copy: no VMEM staging, no layout constraint.
    cp = pltpu.make_async_copy(x_ref, o_ref, sem)
    cp.start()
    cp.wait()


def _single_block_copy(x2: jax.Array, nbytes: int, vmem_limit: int) -> jax.Array:
    # Single block == full array, no grid (block dims == array dims, so no
    # (8,128) divisibility requirement).
    return pl.pallas_call(
        _copy_kernel,
        out_shape=jax.ShapeDtypeStruct(x2.shape, x2.dtype),
        cost_estimate=_copy_cost(nbytes),
        compiler_params=pltpu.CompilerParams(vmem_limit_bytes=vmem_limit),
    )(x2)


def _tiled_copy_2d(x2: jax.Array, br: int, nbytes: int, vmem_limit: int) -> jax.Array:
    # Tile the sublane axis of a lane-dense (rows, C) view.  The trailing
    # partial block (rows % br != 0) is handled by Pallas boundary masking.
    rows, c = x2.shape
    spec = pl.BlockSpec((br, c), lambda i: (i, 0))
    return pl.pallas_call(
        _copy_kernel,
        out_shape=jax.ShapeDtypeStruct(x2.shape, x2.dtype),
        grid_spec=pltpu.PrefetchScalarGridSpec(
            num_scalar_prefetch=0,
            grid=(pl.cdiv(rows, br),),
            in_specs=[spec],
            out_specs=spec,
        ),
        compiler_params=pltpu.CompilerParams(
            dimension_semantics=("parallel",),
            vmem_limit_bytes=vmem_limit,
        ),
        cost_estimate=_copy_cost(nbytes),
    )(x2)


def _hbm_dma_copy(x: jax.Array, nbytes: int) -> jax.Array:
    # Whole-array HBM -> HBM DMA for shapes whose element count is not a
    # multiple of 128 (no padding, no VMEM footprint).
    return pl.pallas_call(
        _dma_copy_kernel,
        out_shape=jax.ShapeDtypeStruct(x.shape, x.dtype),
        in_specs=[pl.BlockSpec(memory_space=pl.ANY)],
        out_specs=pl.BlockSpec(memory_space=pl.ANY),
        scratch_shapes=[pltpu.SemaphoreType.DMA],
        cost_estimate=_copy_cost(nbytes),
    )(x)


def _identity_copy(x: jax.Array) -> jax.Array:
    """Explicit Pallas copy of x (parity-testing path)."""
    if x.size == 0:
        return x

    itemsize = jnp.dtype(x.dtype).itemsize
    nbytes = x.size * itemsize
    block_bytes, vmem_limit = _tuning()
    # Dtype-aware sublane alignment: 8 rows for 4-byte, 16 for 2-byte,
    # 32 for 1-byte dtypes (packed dtypes tile as (16,128)/(32,128)).
    sub = max(8, 32 // itemsize)

    if x.size % 128 == 0:
        # Lane-dense 2-D view: last dim a multiple of 128 -> unmasked
        # vld/vst, no padded VMEM tiles.  Reshape of a contiguous array is
        # layout plumbing (free), not an extra HBM copy.
        c = 128
        for cand in (2048, 1024, 512, 256):
            if x.size % cand == 0 and x.size // cand >= sub:
                c = cand
                break
        rows = x.size // c
        x2 = x.reshape(rows, c)

        if nbytes <= _MIN_TILED_BYTES or rows < 2 * sub:
            out = _single_block_copy(x2, nbytes, vmem_limit)
        else:
            row_bytes = c * itemsize
            br = max(sub, (block_bytes // row_bytes) // sub * sub)
            # Guarantee >= 2 grid steps so both v7x TensorCores participate
            # and DMA-in of block i+1 overlaps DMA-out of block i.
            half = max(sub, (rows // 2) // sub * sub)
            br = min(br, half)
            out = _tiled_copy_2d(x2, br, nbytes, vmem_limit)
        return out.reshape(x.shape)

    # Element count not a multiple of 128: direct HBM->HBM DMA at the
    # original shape (covers the previously-unhandled "untileable" case).
    return _hbm_dma_copy(x, nbytes)


def identity(x: jax.Array, use_kernel: bool = False) -> jax.Array:
    """Pallas implementation of `Identity.forward`.

    Default path is `return x` (zero HBM traffic — the fastest identity is
    no kernel at all).  Set use_kernel=True to run the explicit Pallas copy
    for parity testing; that path always returns a fresh buffer.
    """
    if not use_kernel:
        return x
    return _identity_copy(x)


class Identity:
    """Drop-in counterpart of torch.nn.Identity from ModelAE.py."""

    def __init__(self, use_kernel: bool = False):
        self.use_kernel = use_kernel

    def __call__(self, x: jax.Array) -> jax.Array:
        return identity(x, use_kernel=self.use_kernel)


if __name__ == "__main__":
    key = jax.random.PRNGKey(0)

    # Small NCHW input consistent with the autoencoder context.
    x = jax.random.normal(key, (2, 4, 16, 16), dtype=jnp.float32)

    # Default (production) path: zero-cost identity.
    y0 = jax.block_until_ready(identity(x))
    assert y0.shape == x.shape and y0.dtype == x.dtype
    assert bool(jnp.all(y0 == x))

    # Kernel path, small input -> lane-dense whole-array single-block copy.
    y = jax.block_until_ready(identity(x, use_kernel=True))
    assert y.shape == x.shape and y.dtype == x.dtype
    assert bool(jnp.all(y == x))

    # Larger input (8 MiB) -> lane-dense tiled path with >= 2 parallel steps.
    x_big = jax.random.normal(jax.random.PRNGKey(1), (64, 512, 64), dtype=jnp.float32)
    y_big = jax.block_until_ready(identity(x_big, use_kernel=True))
    assert y_big.shape == x_big.shape and y_big.dtype == x_big.dtype
    assert bool(jnp.all(y_big == x_big))

    # Element count not a multiple of 128 -> direct HBM->HBM DMA path.
    x_odd = jax.random.normal(jax.random.PRNGKey(2), (3, 5, 7), dtype=jnp.float32)
    y_odd = jax.block_until_ready(identity(x_odd, use_kernel=True))
    assert y_odd.shape == x_odd.shape and y_odd.dtype == x_odd.dtype
    assert bool(jnp.all(y_odd == x_odd))

    print("KERNEL_OK")
</pallas_src>

<mosaic_0001>
module attributes {stable_mosaic.version = 11 : i64} {
  func.func @_copy_kernel(%arg0: memref<8x256xf32, #tpu.memory_space<vmem>>, %arg1: memref<8x256xf32, #tpu.memory_space<vmem>>) attributes {dimension_semantics = [], scalar_prefetch = 0 : i64, scratch_operands = 0 : i64, tpu.core_type = #tpu.core_type<tc>} {
    %c0 = arith.constant 0 : index
    %c0_0 = arith.constant 0 : index
    %0 = vector.load %arg0[%c0, %c0_0] : memref<8x256xf32, #tpu.memory_space<vmem>>, vector<8x256xf32>
    %c0_1 = arith.constant 0 : index
    %c0_2 = arith.constant 0 : index
    %1 = vector.load %arg1[%c0_1, %c0_2] : memref<8x256xf32, #tpu.memory_space<vmem>>, vector<8x256xf32>
    tpu.vector_store %arg1[%c0_1, %c0_2], %0 {strides = array<i32>} : memref<8x256xf32, #tpu.memory_space<vmem>>, vector<8x256xf32>,
    return
  }
}

</mosaic_0001>

<llo_original>
// kernel: tpu_custom_call.1
$region0: #{tpu_custom_call.1}
  #allocation0 [shape = 'u32[]', space=smem, size = 0x4, offset = 0x4, fixed_abs, tag = 'smem constant byte address 0x4 - core index']
  #allocation1 [shape = 'u32[72,128]{1,0:T(1,128)}', space=vmem, size = 0x9000, scoped, tag = 'internal scratch']
  %s0 = inlined_call_operand.hbm [shape: f32[8,256], index: 0, kind: input, shape index: {}]
  %s1 = inlined_call_operand.hbm [shape: f32[8,256], index: 1, kind: output, shape index: {}]
  %s2 = sld [smem:[#allocation0]]
  $region18: #{tpu_custom_call.1} parent=0
    _
  %s4 = ssub.s32 1, %s2
  %s5 = scalar_select 0, %s4, %s2
  $region1: #{tpu_custom_call.1} parent=0
    #allocation2 [shape = 'u8[8192]{0}', space=vmem, size = 0x2000, scoped, tag = 'input window, operand 0, single buffered']
    #allocation3 [shape = 's32[1]{0}', space=sflag, size = 0x4, scoped, tag = 'scoped memory for tpu_custom_call.1']
    #allocation4 [shape = 's32[1]{0}', space=sflag, size = 0x4, scoped, tag = 'scoped memory for tpu_custom_call.1']
    #allocation5 [shape = 'u8[8192]{0}', space=vmem, size = 0x2000, scoped, tag = 'output window, operand 0, single buffered']
    %6 = vsyncpa [#allocation3], 0
    %7 = vsyncpa [#allocation4], 0
    // Predicated region
    $region2: #{tpu_custom_call.1} parent=1 // pred_check
      _
    $region3: #{tpu_custom_call.1} parent=1 // pred_check_branch
      %9 = sbr.rel (0) target = $region5
    $region4: #{tpu_custom_call.1} parent=1 // pred_region
      %11 = vsyncadd [#allocation3], 0
      %s13 = sshll.u32 %s0, 4
      %s14 = int_to_ptr.hbm [resolvable:$true] %s13
      %s15 = sshll.u32 [#allocation2], 4
      %s16 = int_to_ptr.vmem [resolvable:$true] %s15
      %18 = dma.hbm_to_vmem [thread:$0]  %s14, 256, %s16, [#allocation3]
    $region5: #{tpu_custom_call.1} parent=1 // pred_fallthru
      _
    // Predicated region
    $region6: #{tpu_custom_call.1} parent=1 // pred_check
      _
    $region7: #{tpu_custom_call.1} parent=1 // pred_check_branch
      %20 = sbr.rel (0) target = $region9
    $region8: #{tpu_custom_call.1} parent=1 // pred_region
      %22 = dma.done [#allocation3], 256
    $region9: #{tpu_custom_call.1} parent=1 // pred_fallthru
      _
    %v23 = vld [vmem:[#allocation2] sm:$0xff]
    %v24 = vld [vmem:[#allocation2 + $0x8] sm:$0xff]
    %25 = vst [vmem:[#allocation5] sm:$0xff] %v23
    %26 = vst [vmem:[#allocation5 + $0x8] sm:$0xff] %v24
    // Predicated region
    $region10: #{tpu_custom_call.1} parent=1 // pred_check
      _
    $region11: #{tpu_custom_call.1} parent=1 // pred_check_branch
      %28 = sbr.rel (0) target = $region13
    $region12: #{tpu_custom_call.1} parent=1 // pred_region
      %30 = vsyncadd [#allocation4], 0
      %s32 = sshll.u32 [#allocation5], 4
      %s33 = int_to_ptr.vmem [resolvable:$true] %s32
      %s34 = sshll.u32 %s1, 4
      %s35 = int_to_ptr.hbm [resolvable:$true] %s34
      %37 = dma.vmem_to_hbm [thread:$0]  %s33, 256, %s35, [#allocation4]
    $region13: #{tpu_custom_call.1} parent=1 // pred_fallthru
      _
    // Predicated region
    $region14: #{tpu_custom_call.1} parent=1 // pred_check
      _
    $region15: #{tpu_custom_call.1} parent=1 // pred_check_branch
      %39 = sbr.rel (0) target = $region17
    $region16: #{tpu_custom_call.1} parent=1 // pred_region
      %41 = dma.done [#allocation4], 256
    $region17: #{tpu_custom_call.1} parent=1 // pred_fallthru
      _
    %42 = vsyncpa [#allocation3], 1
    %43 = vsyncpa [#allocation4], 1

</llo_original>
